<compile_context>
chip_gen: v7x
topology: tpu7x:2x2x1
jax: 0.10.0
libtpu: 0.0.40
codegen_flags: <defaults>
</compile_context>

<pallas_src>
import functools

import numpy as np
import jax
import jax.numpy as jnp
from jax.experimental import pallas as pl
from jax.experimental.pallas import tpu as pltpu

BN_EPS = 1e-5


# --------------------------------------------------------------------------
# in-kernel helpers
# --------------------------------------------------------------------------
def _zero_pads(xpad_ref, *, pad_l, pad_r, L):
    """Zero the left/right 'same'-padding columns of the padded VMEM scratch."""
    rows = xpad_ref.shape[0]
    if pad_l > 0:
        xpad_ref[:, 0:pad_l] = jnp.zeros((rows, pad_l), jnp.float32)
    if pad_r > 0:
        xpad_ref[:, pad_l + L:pad_l + L + pad_r] = jnp.zeros((rows, pad_r),
                                                             jnp.float32)


def _conv_one(x_ref, wdw, wpw, xpad_ref, b, *, K, pad_l):
    """Depthwise 'same' conv + pointwise (1x1) conv for batch element `b`.

    x_ref   : (Bt, Cin, L)       input block (L on lanes)
    wdw     : (Cin, K)   f32     depthwise taps (already loaded)
    wpw     : (Cout, Cin) f32    pointwise weights (already loaded)
    xpad_ref: (Bt*Cin, L+K-1)    padded VMEM scratch (pad columns pre-zeroed)
    returns : (Cout, L) f32
    """
    _, Cin, L = x_ref.shape
    r0 = b * Cin                                   # static row offset
    xpad_ref[r0:r0 + Cin, pad_l:pad_l + L] = x_ref[b].astype(jnp.float32)

    # depthwise conv: per-channel temporal taps on the VPU; init with k=0 term.
    acc = xpad_ref[r0:r0 + Cin, 0:L] * wdw[:, 0:1]
    for k in range(1, K):                          # small static unroll
        acc = acc + xpad_ref[r0:r0 + Cin, k:k + L] * wdw[:, k:k + 1]

    # pointwise conv == (Cout, Cin) @ (Cin, L) on the MXU (L lane-dense).
    # (bias-free: conv biases are cancelled by training-mode BN, see header)
    return jnp.dot(wpw, acc, preferred_element_type=jnp.float32)


# --------------------------------------------------------------------------
# kernels
# --------------------------------------------------------------------------
def _stats_kernel(x_ref, wdw_ref, wpw_ref, stats_ref, xpad_ref, *, K, pad_l):
    """Phase 1: per-batch-tile partial sum / sum-of-squares of y, per channel."""
    Bt, _, L = x_ref.shape
    Cout = wpw_ref.shape[0]
    pad_r = (K - 1) - pad_l
    _zero_pads(xpad_ref, pad_l=pad_l, pad_r=pad_r, L=L)

    wdw = wdw_ref[...].astype(jnp.float32)
    wpw = wpw_ref[...].astype(jnp.float32)

    s = jnp.zeros((Cout, 1), jnp.float32)
    s2 = jnp.zeros((Cout, 1), jnp.float32)
    for b in range(Bt):                            # small static batch-tile loop
        y = _conv_one(x_ref, wdw, wpw, xpad_ref, b, K=K, pad_l=pad_l)
        s = s + jnp.sum(y, axis=1, keepdims=True)
        s2 = s2 + jnp.sum(y * y, axis=1, keepdims=True)
    stats_ref[:, 0:1] = s
    stats_ref[:, 1:2] = s2


def _apply_kernel(*refs, K, pad_l, has_residual):
    """Phase 2: recompute dw+pw, apply folded BN (y*a+b), residual, ReLU."""
    if has_residual:
        x_ref, wdw_ref, wpw_ref, ab_ref, res_ref, o_ref, xpad_ref = refs
    else:
        x_ref, wdw_ref, wpw_ref, ab_ref, o_ref, xpad_ref = refs
        res_ref = None

    Bt, _, L = x_ref.shape
    pad_r = (K - 1) - pad_l
    _zero_pads(xpad_ref, pad_l=pad_l, pad_r=pad_r, L=L)

    wdw = wdw_ref[...].astype(jnp.float32)
    wpw = wpw_ref[...].astype(jnp.float32)
    a = ab_ref[:, 0:1]                             # (Cout, 1) folded BN scale
    bf = ab_ref[:, 1:2]                            # (Cout, 1) folded BN shift

    for b in range(Bt):
        y = _conv_one(x_ref, wdw, wpw, xpad_ref, b, K=K, pad_l=pad_l)
        y = y * a + bf                             # folded BN: one FMA pass
        if res_ref is not None:
            y = y + res_ref[b].astype(jnp.float32)
        o_ref[b] = jnp.maximum(y, 0.0).astype(o_ref.dtype)
    # dropout == identity (eval semantics); see TODO in header.


# --------------------------------------------------------------------------
# wrapper
# --------------------------------------------------------------------------
def _pick_batch_tile(N, Cin, Cout, L, K):
    """Largest divisor of N that keeps the per-step VMEM footprint small while
    leaving >= ~8 grid steps for pipelining / megacore sharding."""
    budget = 6 * 1024 * 1024          # conservative: fits v5e 16 MiB scoped VMEM
    per_b = 4 * (3 * Cin * L + Cin * (K - 1) + 4 * Cout * L)
    cap = min(N, max(1, budget // max(per_b, 1)), max(1, N // 8))
    bt = 1
    for d in range(1, cap + 1):
        if N % d == 0:
            bt = d
    return bt


def matchbox_subblock(x_ncl, params, residual_ncl=None):
    """x_ncl: (N, C_in, L) like PyTorch; returns (N, C_out, L)."""
    w_dw, b_dw, w_pw, b_pw, gamma, beta = params   # conv biases unused by kernels
    Cin, _, K = w_dw.shape                          # (C_in, 1, K) depthwise
    Cout = w_pw.shape[0]                            # (C_out, C_in, 1) pointwise
    N, _, L = x_ncl.shape
    pad_l = (K - 1) // 2                            # PyTorch 'same' left pad

    wdw_ck = w_dw[:, 0, :]                          # (Cin, K)
    wpw_oc = w_pw[:, :, 0]                          # (Cout, Cin)

    Bt = _pick_batch_tile(N, Cin, Cout, L, K)       # batch elements per grid step
    NB = N // Bt

    # ---------------- phase 1: global BN statistics ----------------
    stats = pl.pallas_call(
        functools.partial(_stats_kernel, K=K, pad_l=pad_l),
        out_shape=jax.ShapeDtypeStruct((NB, Cout, 2), jnp.float32),
        grid=(NB,),
        in_specs=[
            pl.BlockSpec((Bt, Cin, L), lambda i: (i, 0, 0)),
            pl.BlockSpec((Cin, K), lambda i: (0, 0)),
            pl.BlockSpec((Cout, Cin), lambda i: (0, 0)),
        ],
        out_specs=pl.BlockSpec((None, Cout, 2), lambda i: (i, 0, 0)),
        scratch_shapes=[pltpu.VMEM((Bt * Cin, L + K - 1), jnp.float32)],
        compiler_params=pltpu.CompilerParams(dimension_semantics=("parallel",)),
    )(x_ncl, wdw_ck, wpw_oc)

    # tiny (NB, Cout, 2) reduction + BN folding in plain XLA
    total = jnp.sum(stats, axis=0)                  # (Cout, 2)
    cnt = jnp.float32(N * L)
    mean = total[:, 0] / cnt
    var = jnp.maximum(total[:, 1] / cnt - mean * mean, 0.0)   # E[y^2] - mean^2
    a = gamma.astype(jnp.float32) * jax.lax.rsqrt(var + BN_EPS)
    b = beta.astype(jnp.float32) - mean * a
    ab = jnp.stack([a, b], axis=1)                  # (Cout, 2) folded BN params

    # ---------------- phase 2: normalize + residual + ReLU ----------------
    has_res = residual_ncl is not None
    in_specs = [
        pl.BlockSpec((Bt, Cin, L), lambda i: (i, 0, 0)),
        pl.BlockSpec((Cin, K), lambda i: (0, 0)),
        pl.BlockSpec((Cout, Cin), lambda i: (0, 0)),
        pl.BlockSpec((Cout, 2), lambda i: (0, 0)),
    ]
    args = [x_ncl, wdw_ck, wpw_oc, ab]
    if has_res:
        in_specs.append(pl.BlockSpec((Bt, Cout, L), lambda i: (i, 0, 0)))
        args.append(residual_ncl)

    out = pl.pallas_call(
        functools.partial(_apply_kernel, K=K, pad_l=pad_l, has_residual=has_res),
        out_shape=jax.ShapeDtypeStruct((N, Cout, L), x_ncl.dtype),
        grid=(NB,),
        in_specs=in_specs,
        out_specs=pl.BlockSpec((Bt, Cout, L), lambda i: (i, 0, 0)),
        scratch_shapes=[pltpu.VMEM((Bt * Cin, L + K - 1), jnp.float32)],
        compiler_params=pltpu.CompilerParams(dimension_semantics=("parallel",)),
    )(*args)
    return out


# --------------------------------------------------------------------------
# pure-JAX reference (mirrors the PyTorch forward, eval dropout),
# including the conv biases (which the kernel provably drops under BN).
# --------------------------------------------------------------------------
def reference(x_ncl, params, residual_ncl=None):
    w_dw, b_dw, w_pw, b_pw, gamma, beta = params
    Cin, _, K = w_dw.shape
    pad_l = (K - 1) // 2
    pad_r = (K - 1) - pad_l
    dw = jax.lax.conv_general_dilated(
        x_ncl, w_dw, window_strides=(1,), padding=[(pad_l, pad_r)],
        dimension_numbers=("NCH", "OIH", "NCH"),
        feature_group_count=Cin) + b_dw[None, :, None]
    pw = jax.lax.conv_general_dilated(
        dw, w_pw, window_strides=(1,), padding="VALID",
        dimension_numbers=("NCH", "OIH", "NCH")) + b_pw[None, :, None]
    mean = jnp.mean(pw, axis=(0, 2), keepdims=True)
    var = jnp.mean((pw - mean) ** 2, axis=(0, 2), keepdims=True)
    y = (pw - mean) * jax.lax.rsqrt(var + BN_EPS)
    y = y * gamma[None, :, None] + beta[None, :, None]
    if residual_ncl is not None:
        y = y + residual_ncl
    return jnp.maximum(y, 0.0)


def init_params(key, in_channels, out_channels, kernel_size):
    k1, k2, k3, k4 = jax.random.split(key, 4)
    w_dw = 0.1 * jax.random.normal(k1, (in_channels, 1, kernel_size), jnp.float32)
    b_dw = 0.1 * jax.random.normal(k2, (in_channels,), jnp.float32)
    w_pw = 0.1 * jax.random.normal(k3, (out_channels, in_channels, 1), jnp.float32)
    b_pw = 0.1 * jax.random.normal(k4, (out_channels,), jnp.float32)
    gamma = jnp.ones((out_channels,), jnp.float32)
    beta = jnp.zeros((out_channels,), jnp.float32)
    return (w_dw, b_dw, w_pw, b_pw, gamma, beta)


if __name__ == "__main__":
    N, C_IN, C_OUT, L, K = 2, 4, 8, 16, 3
    key = jax.random.PRNGKey(0)
    kx, kr, kp = jax.random.split(key, 3)
    x = jax.random.normal(kx, (N, C_IN, L), jnp.float32)          # PyTorch NCL
    residual = jax.random.normal(kr, (N, C_OUT, L), jnp.float32)
    params = init_params(kp, C_IN, C_OUT, K)

    # no residual
    out0 = jax.block_until_ready(matchbox_subblock(x, params, None))
    ref0 = reference(x, params, None)
    np.testing.assert_allclose(np.asarray(out0), np.asarray(ref0),
                               rtol=1e-4, atol=1e-5)

    # with residual
    out1 = jax.block_until_ready(matchbox_subblock(x, params, residual))
    ref1 = reference(x, params, residual)
    np.testing.assert_allclose(np.asarray(out1), np.asarray(ref1),
                               rtol=1e-4, atol=1e-5)

    print("KERNEL_OK")
</pallas_src>

<mosaic_0001>
module attributes {stable_mosaic.version = 11 : i64} {
  func.func @_stats_kernel(%arg0: i32, %arg1: memref<1x4x16xf32, #tpu.memory_space<vmem>>, %arg2: memref<4x3xf32, #tpu.memory_space<vmem>>, %arg3: memref<8x4xf32, #tpu.memory_space<vmem>>, %arg4: memref<1x8x2xf32, #tpu.memory_space<vmem>>, %arg5: memref<4x18xf32, #tpu.memory_space<vmem>>) attributes {dimension_semantics = [#tpu.dimension_semantics<parallel>], iteration_bounds = array<i64: 2>, scalar_prefetch = 0 : i64, scratch_operands = 1 : i64, tpu.core_type = #tpu.core_type<tc>, window_params = [{transform_indices = @transform_0, window_bounds = array<i64: 1, 4, 16>}, {pipeline_mode = #tpu.pipeline_mode<synchronous>, transform_indices = @transform_1, window_bounds = array<i64: 4, 3>}, {pipeline_mode = #tpu.pipeline_mode<synchronous>, transform_indices = @transform_2, window_bounds = array<i64: 8, 4>}, {transform_indices = @transform_3, window_bounds = array<i64: 1, 8, 2>}]} {
    %cst = arith.constant 0.000000e+00 : f32
    %0 = vector.broadcast %cst : f32 to vector<4x1xf32>
    %c0 = arith.constant 0 : index
    %c0_0 = arith.constant 0 : index
    %1 = vector.load %arg5[%c0, %c0_0] : memref<4x18xf32, #tpu.memory_space<vmem>>, vector<4x1xf32>
    tpu.vector_store %arg5[%c0, %c0_0], %0 {strides = array<i32>} : memref<4x18xf32, #tpu.memory_space<vmem>>, vector<4x1xf32>,
    %cst_1 = arith.constant 0.000000e+00 : f32
    %2 = vector.broadcast %cst_1 : f32 to vector<4x1xf32>
    %c0_2 = arith.constant 0 : index
    %c17 = arith.constant 17 : index
    %3 = vector.load %arg5[%c0_2, %c17] : memref<4x18xf32, #tpu.memory_space<vmem>>, vector<4x1xf32>
    tpu.vector_store %arg5[%c0_2, %c17], %2 {strides = array<i32>} : memref<4x18xf32, #tpu.memory_space<vmem>>, vector<4x1xf32>,
    %c0_3 = arith.constant 0 : index
    %c0_4 = arith.constant 0 : index
    %4 = vector.load %arg2[%c0_3, %c0_4] : memref<4x3xf32, #tpu.memory_space<vmem>>, vector<4x3xf32>
    %c0_5 = arith.constant 0 : index
    %c0_6 = arith.constant 0 : index
    %5 = vector.load %arg3[%c0_5, %c0_6] : memref<8x4xf32, #tpu.memory_space<vmem>>, vector<8x4xf32>
    %cst_7 = arith.constant 0.000000e+00 : f32
    %6 = vector.broadcast %cst_7 : f32 to vector<8x1xf32>
    %cst_8 = arith.constant 0.000000e+00 : f32
    %7 = vector.broadcast %cst_8 : f32 to vector<8x1xf32>
    %c0_9 = arith.constant 0 : index
    %c0_10 = arith.constant 0 : index
    %c0_11 = arith.constant 0 : index
    %8 = vector.load %arg1[%c0_9, %c0_10, %c0_11] : memref<1x4x16xf32, #tpu.memory_space<vmem>>, vector<1x4x16xf32>
    %9 = vector.shape_cast %8 : vector<1x4x16xf32> to vector<4x16xf32>
    %c0_12 = arith.constant 0 : index
    %c1 = arith.constant 1 : index
    %10 = vector.load %arg5[%c0_12, %c1] : memref<4x18xf32, #tpu.memory_space<vmem>>, vector<4x16xf32>
    tpu.vector_store %arg5[%c0_12, %c1], %9 {strides = array<i32>} : memref<4x18xf32, #tpu.memory_space<vmem>>, vector<4x16xf32>,
    %c0_13 = arith.constant 0 : index
    %c0_14 = arith.constant 0 : index
    %11 = vector.load %arg5[%c0_13, %c0_14] : memref<4x18xf32, #tpu.memory_space<vmem>>, vector<4x16xf32>
    %12 = vector.extract_strided_slice %4 {offsets = [0, 0], sizes = [4, 1], strides = [1, 1]} : vector<4x3xf32> to vector<4x1xf32>
    %13 = vector.broadcast %12 : vector<4x1xf32> to vector<4x16xf32>
    %14 = arith.mulf %11, %13 : vector<4x16xf32>
    %c0_15 = arith.constant 0 : index
    %c1_16 = arith.constant 1 : index
    %15 = vector.load %arg5[%c0_15, %c1_16] : memref<4x18xf32, #tpu.memory_space<vmem>>, vector<4x16xf32>
    %16 = vector.extract_strided_slice %4 {offsets = [0, 1], sizes = [4, 1], strides = [1, 1]} : vector<4x3xf32> to vector<4x1xf32>
    %17 = vector.broadcast %16 : vector<4x1xf32> to vector<4x16xf32>
    %18 = arith.mulf %15, %17 : vector<4x16xf32>
    %19 = arith.addf %14, %18 : vector<4x16xf32>
    %c0_17 = arith.constant 0 : index
    %c2 = arith.constant 2 : index
    %20 = vector.load %arg5[%c0_17, %c2] : memref<4x18xf32, #tpu.memory_space<vmem>>, vector<4x16xf32>
    %21 = vector.extract_strided_slice %4 {offsets = [0, 2], sizes = [4, 1], strides = [1, 1]} : vector<4x3xf32> to vector<4x1xf32>
    %22 = vector.broadcast %21 : vector<4x1xf32> to vector<4x16xf32>
    %23 = arith.mulf %20, %22 : vector<4x16xf32>
    %24 = arith.addf %19, %23 : vector<4x16xf32>
    %cst_18 = arith.constant dense<0.000000e+00> : vector<8x16xf32>
    %25 = tpu.matmul %5, %24, %cst_18 {dimension_numbers = #tpu.dot_dimension_numbers<[1], [0], [0], [1], [0, 0, 1, 1], [], []>} : vector<8x4xf32>, vector<4x16xf32>, vector<8x16xf32> -> vector<8x16xf32>
    %cst_19 = arith.constant dense<0.000000e+00> : vector<8xf32>
    %26 = vector.multi_reduction <add>, %25, %cst_19 [1] : vector<8x16xf32> to vector<8xf32>
    %27 = vector.shape_cast %26 : vector<8xf32> to vector<8x1xf32>
    %28 = arith.addf %6, %27 : vector<8x1xf32>
    %29 = arith.mulf %25, %25 : vector<8x16xf32>
    %cst_20 = arith.constant dense<0.000000e+00> : vector<8xf32>
    %30 = vector.multi_reduction <add>, %29, %cst_20 [1] : vector<8x16xf32> to vector<8xf32>
    %31 = vector.shape_cast %30 : vector<8xf32> to vector<8x1xf32>
    %32 = arith.addf %7, %31 : vector<8x1xf32>
    %c0_21 = arith.constant 0 : index
    %c0_22 = arith.constant 0 : index
    %c0_23 = arith.constant 0 : index
    %33 = vector.load %arg4[%c0_21, %c0_22, %c0_23] : memref<1x8x2xf32, #tpu.memory_space<vmem>>, vector<1x8x1xf32>
    %34 = vector.shape_cast %33 : vector<1x8x1xf32> to vector<8x1xf32>
    %35 = vector.shape_cast %28 : vector<8x1xf32> to vector<1x8x1xf32>
    tpu.vector_store %arg4[%c0_21, %c0_22, %c0_23], %35 {strides = array<i32>} : memref<1x8x2xf32, #tpu.memory_space<vmem>>, vector<1x8x1xf32>,
    %c0_24 = arith.constant 0 : index
    %c0_25 = arith.constant 0 : index
    %c1_26 = arith.constant 1 : index
    %36 = vector.load %arg4[%c0_24, %c0_25, %c1_26] : memref<1x8x2xf32, #tpu.memory_space<vmem>>, vector<1x8x1xf32>
    %37 = vector.shape_cast %36 : vector<1x8x1xf32> to vector<8x1xf32>
    %38 = vector.shape_cast %32 : vector<8x1xf32> to vector<1x8x1xf32>
    tpu.vector_store %arg4[%c0_24, %c0_25, %c1_26], %38 {strides = array<i32>} : memref<1x8x2xf32, #tpu.memory_space<vmem>>, vector<1x8x1xf32>,
    return
  }
  func.func @transform_0(%arg0: i32) -> (i32, i32, i32) {
    %c0_i32 = arith.constant 0 : i32
    %c0_i32_0 = arith.constant 0 : i32
    %c0_i32_1 = arith.constant 0 : i32
    return %arg0, %c0_i32, %c0_i32_0 : i32, i32, i32
  }
  func.func @transform_1(%arg0: i32) -> (i32, i32) {
    %c0_i32 = arith.constant 0 : i32
    %c0_i32_0 = arith.constant 0 : i32
    %c0_i32_1 = arith.constant 0 : i32
    return %c0_i32, %c0_i32_0 : i32, i32
  }
  func.func @transform_2(%arg0: i32) -> (i32, i32) {
    %c0_i32 = arith.constant 0 : i32
    %c0_i32_0 = arith.constant 0 : i32
    %c0_i32_1 = arith.constant 0 : i32
    return %c0_i32, %c0_i32_0 : i32, i32
  }
  func.func @transform_3(%arg0: i32) -> (i32, i32, i32) {
    %c0_i32 = arith.constant 0 : i32
    %c0_i32_0 = arith.constant 0 : i32
    %c0_i32_1 = arith.constant 0 : i32
    return %arg0, %c0_i32, %c0_i32_0 : i32, i32, i32
  }
}

</mosaic_0001>

<llo_original>
// kernel: tpu_custom_call.1
$region0: #{tpu_custom_call.1}
  #allocation0 [shape = 'u32[]', space=smem, size = 0x4, offset = 0x4, fixed_abs, tag = 'smem constant byte address 0x4 - core index']
  #allocation1 [shape = 'u32[144,128]{1,0:T(1,128)}', space=vmem, size = 0x12000, scoped, tag = 'internal scratch']
  #allocation2 [shape = 'f32[4,18]{1,0:T(4,128)}', space=vmem, size = 0x800, scoped, tag = 'scratch operand']
  %s0 = inlined_call_operand.vmem [shape: f32[2,4,16], index: 0, kind: input, shape index: {}]
  %s1 = inlined_call_operand.vmem [shape: f32[4,3], index: 1, kind: input, shape index: {}]
  %s2 = inlined_call_operand.vmem [shape: f32[8,4], index: 2, kind: input, shape index: {}]
  %s3 = inlined_call_operand.vmem [shape: f32[2,8,2], index: 3, kind: output, shape index: {}]
  %s4 = sld [smem:[#allocation0]]
  $region45: #{tpu_custom_call.1} parent=0
    _
  %s6 = ssub.s32 1, %s4
  %s7 = scalar_select 0, %s6, %s4
  loop: start=0, step=1, limit=4
  $region2: #{tpu_custom_call.1} parent=0 // loop_pre_header
    _
  $region3: #{tpu_custom_call.1} parent=0 // loop_header
    %s9 = sphi 0, %s13
    %p10 = scmp.ge.s32.totalorder %s9, 4
    %s19 = sphi 0, %s21
    %s22 = sphi 0, %s19
    %s23 = sphi 0, %s22
    %s39 = sphi 0, %s23
    %s43 = sphi 0, %s43
    %s45 = sphi 0, %s43
    %s46 = sphi 0, %s45
    %s60 = sphi 0, %s46
    %s64 = sphi 0, %s64
    %s66 = sphi 0, %s64
    %s67 = sphi 0, %s66
    %s81 = sphi 0, %s67
    %s87 = sphi 0, %s89
    %s90 = sphi 0, %s87
    %s91 = sphi 0, %s90
    %s107 = sphi 0, %s91
  $region4: #{tpu_custom_call.1} parent=0 // loop_header_branch
    %12 = sbr.rel (%p10) target = $region8
  $region5: #{tpu_custom_call.1} parent=0 // loop_body
    %s14 = ssub.s32 %s9, 1
    %s15 = ssub.s32 %s9, 2
    %s16 = sadd.s32 %s9, 1
    %s17 = ssub.s32 %s9, %s16
    %p18 = scmp.eq.s32.totalorder %s17, 0
    %s20 = sadd.s32 %s19, 1
    %s21 = scalar_select %p18, %s19, %s20
    %p24 = pneg %p18
    %p25 = scmp.eq.s32.totalorder %s9, 1
    %p26 = por %p24, %p25
    %p27 = scmp.ne.s32.totalorder %s19, %s22
    %p28 = scmp.eq.s32.totalorder %s9, 0
    %p29 = por %p27, %p28
    %p30 = scmp.ne.s32.totalorder %s19, %s22
    %p31 = scmp.eq.s32.totalorder %s14, 1
    %p32 = por %p30, %p31
    %p33 = scmp.ne.s32.totalorder %s22, %s23
    %p34 = scmp.eq.s32.totalorder %s14, 0
    %p35 = por %p33, %p34
    %p36 = scmp.ne.s32.totalorder %s22, %s23
    %p37 = scmp.eq.s32.totalorder %s15, 1
    %p38 = por %p36, %p37
    %p40 = scmp.ne.s32.totalorder %s23, %s39
    %p41 = scmp.eq.s32.totalorder %s15, 0
    %p42 = por %p40, %p41
    %s44 = sadd.s32 %s43, 1
    %p47 = scmp.eq.s32.totalorder %s9, 1
    %p48 = scmp.ne.s32.totalorder %s43, %s45
    %p49 = scmp.eq.s32.totalorder %s9, 0
    %p50 = por %p48, %p49
    %p51 = scmp.ne.s32.totalorder %s43, %s45
    %p52 = scmp.eq.s32.totalorder %s14, 1
    %p53 = por %p51, %p52
    %p54 = scmp.ne.s32.totalorder %s45, %s46
    %p55 = scmp.eq.s32.totalorder %s14, 0
    %p56 = por %p54, %p55
    %p57 = scmp.ne.s32.totalorder %s45, %s46
    %p58 = scmp.eq.s32.totalorder %s15, 1
    %p59 = por %p57, %p58
    %p61 = scmp.ne.s32.totalorder %s46, %s60
    %p62 = scmp.eq.s32.totalorder %s15, 0
    %p63 = por %p61, %p62
    %s65 = sadd.s32 %s64, 1
    %p68 = scmp.eq.s32.totalorder %s9, 1
    %p69 = scmp.ne.s32.totalorder %s64, %s66
    %p70 = scmp.eq.s32.totalorder %s9, 0
    %p71 = por %p69, %p70
    %p72 = scmp.ne.s32.totalorder %s64, %s66
    %p73 = scmp.eq.s32.totalorder %s14, 1
    %p74 = por %p72, %p73
    %p75 = scmp.ne.s32.totalorder %s66, %s67
    %p76 = scmp.eq.s32.totalorder %s14, 0
    %p77 = por %p75, %p76
    %p78 = scmp.ne.s32.totalorder %s66, %s67
    %p79 = scmp.eq.s32.totalorder %s15, 1
    %p80 = por %p78, %p79
    %p82 = scmp.ne.s32.totalorder %s67, %s81
    %p83 = scmp.eq.s32.totalorder %s15, 0
    %p84 = por %p82, %p83
    %s85 = ssub.s32 %s9, %s16
    %p86 = scmp.eq.s32.totalorder %s85, 0
    %s88 = sadd.s32 %s87, 1
    %s89 = scalar_select %p86, %s87, %s88
    %p92 = pneg %p86
    %p93 = scmp.eq.s32.totalorder %s9, 1
    %p94 = por %p92, %p93
    %p95 = scmp.ne.s32.totalorder %s87, %s90
    %p96 = scmp.eq.s32.totalorder %s9, 0
    %p97 = por %p95, %p96
    %p98 = scmp.ne.s32.totalorder %s87, %s90
    %p99 = scmp.eq.s32.totalorder %s14, 1
    %p100 = por %p98, %p99
    %p101 = scmp.ne.s32.totalorder %s90, %s91
    %p102 = scmp.eq.s32.totalorder %s14, 0
    %p103 = por %p101, %p102
    %p104 = scmp.ne.s32.totalorder %s90, %s91
    %p105 = scmp.eq.s32.totalorder %s15, 1
    %p106 = por %p104, %p105
    %p108 = scmp.ne.s32.totalorder %s91, %s107
    %p109 = scmp.eq.s32.totalorder %s15, 0
    %p110 = por %p108, %p109
    %p111 = scmp.le.s32.totalorder 1, %s9
    %p112 = scmp.lt.s32.totalorder %s9, 3
    %p113 = pnand %p111, %p112
    %p114 = pneg %p113
    // Predicated region
    $region9: #{tpu_custom_call.1} parent=5 // pred_check
      _
    $region10: #{tpu_custom_call.1} parent=5 // pred_check_branch
      %116 = sbr.rel (%p113) target = $region12
    $region11: #{tpu_custom_call.1} parent=5 // pred_region
      %s117 = ssub.s32 %s9, 1
      // Predicated region
      $region13: #{tpu_custom_call.1} parent=11 // pred_check
        %p118 = pneg %p56
      $region14: #{tpu_custom_call.1} parent=11 // pred_check_branch
        %120 = sbr.rel (%p118) target = $region16
      $region15: #{tpu_custom_call.1} parent=11 // pred_region
        _
      $region16: #{tpu_custom_call.1} parent=11 // pred_fallthru
        _
      // Predicated region
      $region17: #{tpu_custom_call.1} parent=11 // pred_check
        %p121 = pneg %p77
      $region18: #{tpu_custom_call.1} parent=11 // pred_check_branch
        %123 = sbr.rel (%p121) target = $region20
      $region19: #{tpu_custom_call.1} parent=11 // pred_region
        _
      $region20: #{tpu_custom_call.1} parent=11 // pred_fallthru
        _
    $region12: #{tpu_custom_call.1} parent=5 // pred_fallthru
      _
    %p124 = scmp.lt.s32.totalorder %s9, 2
    // Predicated region
    $region21: #{tpu_custom_call.1} parent=5 // pred_check
      %p125 = pneg %p124
    $region22: #{tpu_custom_call.1} parent=5 // pred_check_branch
      %127 = sbr.rel (%p125) target = $region24
    $region23: #{tpu_custom_call.1} parent=5 // pred_region
      // Predicated region
      $region25: #{tpu_custom_call.1} parent=23 // pred_check
        %p128 = pneg %p29
      $region26: #{tpu_custom_call.1} parent=23 // pred_check_branch
        %130 = sbr.rel (%p128) target = $region28
      $region27: #{tpu_custom_call.1} parent=23 // pred_region
        %p131 = scmp.lt.s32.totalorder %s9, 1
        %s132 = scalar_select %p131, %s9, 1
        %s133 = smul.addr %s132, 4
        %s134 = scalar_lea.vmem %s0, %s133
      $region28: #{tpu_custom_call.1} parent=23 // pred_fallthru
        _
    $region24: #{tpu_custom_call.1} parent=5 // pred_fallthru
      _
    %p135 = scmp.le.s32.totalorder 1, %s9
    %p136 = scmp.lt.s32.totalorder %s9, 3
    %p137 = pnand %p135, %p136
    %p138 = pneg %p137
    // Predicated region
    $region29: #{tpu_custom_call.1} parent=5 // pred_check
      _
    $region30: #{tpu_custom_call.1} parent=5 // pred_check_branch
      %140 = sbr.rel (%p137) target = $region32
    $region31: #{tpu_custom_call.1} parent=5 // pred_region
      %s141 = ssub.s32 %s9, 1
      %p142 = scmp.lt.s32.totalorder %s14, 1
      %s143 = scalar_select %p142, %s14, 1
      %s144 = smul.addr %s143, 4
      %s145 = scalar_lea.vmem %s0, %s144
      %p146 = pneg %p35
      %p147 = pneg %p32
      %p148 = pneg %p56
      %p149 = pneg %p53
      %p150 = pneg %p77
      %p151 = pneg %p74
      %p152 = pneg %p103
      %p153 = pneg %p100
      %p154 = scmp.lt.s32.totalorder %s14, 1
      %s155 = scalar_select %p154, %s14, 1
      %s156 = smul.addr %s155, 8
      %s157 = scalar_lea.vmem %s3, %s156
      %p158 = scmp.lt.s32.totalorder %s14, 1
      %s159 = scalar_select %p158, %s14, 1
      %s160 = smul.addr %s159, 4
      %s161 = scalar_lea.vmem %s0, %s160
      %p162 = scmp.lt.s32.totalorder %s14, 1
      %s163 = scalar_select %p162, %s14, 1
      %s164 = smul.addr %s163, 8
      %s165 = scalar_lea.vmem %s3, %s164
      %vm166 = vcmask 3072
      %167 = vst.msk [vmem:[#allocation2] sm:$0xf] %vm166, 0.0
      %vm168 = vcmask 142472
      %169 = vst.msk [vmem:[#allocation2] sm:$0xf] %vm168, 0.0
      %v170 = vld [vmem:[%s1] sm:$0xf]
      %v171 = vld [vmem:[%s2] sm:$0xff]
      %v172 = vld [vmem:[%s161] sm:$0xf]
      %174 = vrot.lane.b32.xlu0 %v172, 1
      %v175 = vpop.permute.xlu0 %174
      %vm177 = vcmask 134152
      %178 = vst.msk [vmem:[#allocation2] sm:$0xf] %vm177, %v175
      %v179 = vld [vmem:[#allocation2] sm:$0xf]
      %181 = vset.pattern.permute.xlu0 0
      %182 = vperm.xlu0 %181, %v170
      %v183 = vpop.permute.xlu0 %182
      %v185 = vmul.f32 %v179, %v183
      %186 = vset.pattern.permute.xlu0 1
      %187 = vperm.xlu0 %186, %v170
      %v188 = vpop.permute.xlu0 %187
      %v190 = vmul.f32 %v179, %v188
      %192 = vrot.lane.b32.xlu0 %v190, 127
      %v193 = vpop.permute.xlu0 %192
      %v195 = vadd.f32 %v185, %v193
      %196 = vset.pattern.permute.xlu0 2
      %197 = vperm.xlu0 %196, %v170
      %v198 = vpop.permute.xlu0 %197
      %v200 = vmul.f32 %v179, %v198
      %202 = vrot.lane.b32.xlu0 %v200, 126
      %v203 = vpop.permute.xlu0 %202
      %v205 = vadd.f32 %v195, %v203
      %vm206 = vcmask 31744
      %v208 = vsel %vm206, %v171, 0
      %vm210 = vcmask 1043456
      %v212 = vsel %vm210, %v205, 0
      %214 = vmatprep.subr.mxu0 0.0
      %215 = vmatpush1.msra.mxu0 %v212
      %216 = vmatprep.subr.mxu0 0.0
      %217 = vmatpush1.msra.mxu0 0.0
      %218 = vmatprep.subr.mxu0 0.0
      %219 = vmatpush1.msra.mxu0 0.0
      %220 = vmatprep.subr.mxu0 0.0
      %221 = vmatpush1.msra.mxu0 0.0
      %222 = vmatprep.subr.mxu0 0.0
      %223 = vmatpush1.msra.mxu0 0.0
      %224 = vmatprep.subr.mxu0 0.0
      %225 = vmatpush1.msra.mxu0 0.0
      %226 = vmatprep.subr.mxu0 0.0
      %227 = vmatpush1.msra.mxu0 0.0
      %228 = vmatprep.subr.mxu0 0.0
      %229 = vmatpush1.msra.mxu0 0.0
      %230 = vmatprep.subr.mxu0 0.0
      %231 = vmatpush1.msra.mxu0 0.0
      %232 = vmatprep.subr.mxu0 0.0
      %233 = vmatpush1.msra.mxu0 0.0
      %234 = vmatprep.subr.mxu0 0.0
      %235 = vmatpush1.msra.mxu0 0.0
      %236 = vmatprep.subr.mxu0 0.0
      %237 = vmatpush1.msra.mxu0 0.0
      %238 = vmatprep.subr.mxu0 0.0
      %239 = vmatpush1.msra.mxu0 0.0
      %240 = vmatprep.subr.mxu0 0.0
      %241 = vmatpush1.msra.mxu0 0.0
      %242 = vmatprep.subr.mxu0 0.0
      %243 = vmatpush1.msra.mxu0 0.0
      %244 = vmatprep.subr.mxu0 0.0
      %245 = vmatpush1.msra.mxu0 0.0
      %246 = vmatprep.subr.mxu0 0.0
      %247 = vmatpush1.msra.mxu0 0.0
      %248 = vmatprep.subr.mxu0 0.0
      %249 = vmatpush1.msra.mxu0 0.0
      %250 = vmatprep.subr.mxu0 0.0
      %251 = vmatpush1.msra.mxu0 0.0
      %252 = vmatprep.subr.mxu0 0.0
      %253 = vmatpush1.msra.mxu0 0.0
      %254 = vmatprep.subr.mxu0 0.0
      %255 = vmatpush1.msra.mxu0 0.0
      %256 = vmatprep.subr.mxu0 0.0
      %257 = vmatpush1.msra.mxu0 0.0
      %258 = vmatprep.subr.mxu0 0.0
      %259 = vmatpush1.msra.mxu0 0.0
      %260 = vmatprep.subr.mxu0 0.0
      %261 = vmatpush1.msra.mxu0 0.0
      %262 = vmatprep.subr.mxu0 0.0
      %263 = vmatpush1.msra.mxu0 0.0
      %264 = vmatprep.subr.mxu0 0.0
      %265 = vmatpush1.msra.mxu0 0.0
      %266 = vmatprep.subr.mxu0 0.0
      %267 = vmatpush1.msra.mxu0 0.0
      %268 = vmatprep.subr.mxu0 0.0
      %269 = vmatpush1.msra.mxu0 0.0
      %270 = vmatprep.subr.mxu0 0.0
      %271 = vmatpush1.msra.mxu0 0.0
      %272 = vmatprep.subr.mxu0 0.0
      %273 = vmatpush1.msra.mxu0 0.0
      %274 = vmatprep.subr.mxu0 0.0
      %275 = vmatpush1.msra.mxu0 0.0
      %276 = vmatprep.subr.mxu0 0.0
      %277 = vmatpush1.msra.mxu0 0.0
      %278 = vmatprep.mubr.f32.mxu0 0.0
      %279 = vmatmul.mubr.f32.gmra.mrb[0].mxu0 %v208
      %v280 = vpop.f32.mrb[0].mxu0
      %v281 = vadd.f32 0.0, %v280
      %v282 = vpop.f32.mrb[0].mxu0
      %283 = vdwg.mxu0
      %vm284 = vcmask 130048
      %v285 = vsel %vm284, %v281, 0.0
      %286 = vadd.xlane.f32.xlu0 %v285
      %v287 = vpop.xlane.xlu0 %286
      %v288 = vadd.f32 %v287, 0.0
      %v289 = vmul.f32 %v281, %v281
      %v290 = vsel %vm284, %v289, 0.0
      %291 = vadd.xlane.f32.xlu0 %v290
      %v292 = vpop.xlane.xlu0 %291
      %v293 = vadd.f32 %v292, 0.0
      %vm294 = vcmask 7168
      %295 = vst.msk [vmem:[%s165] sm:$0xff] %vm294, %v288
      %vm296 = vcmask 15368
      %297 = vst.msk [vmem:[%s165] sm:$0xff] %vm296, %v293
      %p298 = scmp.lt.s32.totalorder %s14, 1
      %s299 = scalar_select %p298, %s14, 1
      %s300 = smul.addr %s299, 8
      %s301 = scalar_lea.vmem %s3, %s300
      // Predicated region
      $region33: #{tpu_custom_call.1} parent=31 // pred_check
        %p302 = pneg %p100
      $region34: #{tpu_custom_call.1} parent=31 // pred_check_branch
        %304 = sbr.rel (%p302) target = $region36
      $region35: #{tpu_custom_call.1} parent=31 // pred_region
        _
      $region36: #{tpu_custom_call.1} parent=31 // pred_fallthru
        _
    $region32: #{tpu_custom_call.1} parent=5 // pred_fallthru
      _
    %p305 = scmp.le.s32.totalorder 2, %s9
    // Predicated region
    $region37: #{tpu_custom_call.1} parent=5 // pred_check
      %p306 = pneg %p305
    $region38: #{tpu_custom_call.1} parent=5 // pred_check_branch
      %308 = sbr.rel (%p306) target = $region40
    $region39: #{tpu_custom_call.1} parent=5 // pred_region
      %s309 = ssub.s32 %s9, 2
      // Predicated region
      $region41: #{tpu_custom_call.1} parent=39 // pred_check
        %p310 = pneg %p106
      $region42: #{tpu_custom_call.1} parent=39 // pred_check_branch
        %312 = sbr.rel (%p310) target = $region44
      $region43: #{tpu_custom_call.1} parent=39 // pred_region
        %p313 = scmp.lt.s32.totalorder %s15, 1
        %s314 = scalar_select %p313, %s15, 1
        %s315 = smul.addr %s314, 8
        %s316 = scalar_lea.vmem %s3, %s315
      $region44: #{tpu_custom_call.1} parent=39 // pred_fallthru
        _
    $region40: #{tpu_custom_call.1} parent=5 // pred_fallthru
      _
  $region6: #{tpu_custom_call.1} parent=0 // loop_footer
    %s13 = sadd.s32 1, %s9
  $region7: #{tpu_custom_call.1} parent=0 // loop_footer_branch
    %8 = sbr.rel target = $region3
  $region8: #{tpu_custom_call.1} parent=0 // loop_exit
    _

</llo_original>
